<compile_context>
chip_gen: v6e
topology: v6e:2x2x1
jax: 0.10.0
libtpu: 0.0.40
codegen_flags: <defaults>
</compile_context>

<pallas_src>
import functools

import jax
import jax.numpy as jnp
from jax import lax
from jax.experimental import pallas as pl
from jax.experimental.pallas import tpu as pltpu


def _ext_entropy_sum(v):
    """Entropy of softmax over the 4x-extended vector, summed over leading dims.

    v: (tn, tc, L) f32.  a = v/4, repeated 4x ->
    H = m + log(4*sum(e)) - sum(e*a)/sum(e),  e = exp(a - m).
    Returns shape (1, 1) f32 (sum over tn and tc).
    """
    a = v * 0.25
    m = jnp.max(a, axis=-1, keepdims=True)
    e = jnp.exp(a - m)
    s = jnp.sum(e, axis=-1, keepdims=True)
    se = jnp.sum(e * a, axis=-1, keepdims=True)
    inv_s = pl.reciprocal(s, approx=False)          # exact: keeps 1e-5 tolerance
    ent = (m + jnp.log(4.0 * s)) - se * inv_s       # (tn, tc, 1)
    tot = jnp.sum(ent, axis=0)                      # (tc, 1)
    return jnp.sum(tot, axis=0, keepdims=True)      # (1, 1)


def _extent_loss_kernel(x_ref, o_ref, acc_ref, hsum_ref, wsum_ref, *,
                        n_batch, tn, fin_chunk):
    ni = pl.program_id(1)
    last = pl.num_programs(1) - 1

    x_blk = x_ref[...]                               # (tn, tc, h, w), input dtype

    # f32 batch-partial sum of this block without a (tn, tc, h, w) f32 temp:
    # per-sample widening adds into one running f32 partial.
    bs = x_blk[0].astype(jnp.float32)
    for i in range(1, tn):
        bs = bs + x_blk[i].astype(jnp.float32)

    # Per-sample h/w maxima -> extended-softmax entropies (summed over tn, tc).
    v_h = jnp.max(x_blk, axis=-1).astype(jnp.float32)   # max over w -> (tn, tc, h)
    v_w = jnp.max(x_blk, axis=-2).astype(jnp.float32)   # max over h -> (tn, tc, w)
    eh = _ext_entropy_sum(v_h)                           # (1, 1)
    ew = _ext_entropy_sum(v_w)                           # (1, 1)

    @pl.when(ni == 0)
    def _first():
        acc_ref[...] = bs                                # assign (no zero + reload)
        hsum_ref[...] = eh
        wsum_ref[...] = ew

    @pl.when(ni > 0)
    def _rest():
        acc_ref[...] += bs
        hsum_ref[...] += eh
        wsum_ref[...] += ew

    # Finalize ent_m for this channel tile once the batch sum is complete.
    @pl.when(ni == last)
    def _finalize():
        tc_, h_, _w_ = acc_ref.shape
        inv_n = jnp.float32(1.0 / n_batch)

        # max of the batch mean (fold 1/n after the max; 1/n > 0)
        m = jnp.max(jnp.max(acc_ref[...], axis=-1, keepdims=True),
                    axis=-2, keepdims=True) * inv_n          # (tc, 1, 1)

        nchunks = h_ // fin_chunk

        def body(ci, carry):
            s, se = carry
            start = pl.multiple_of(ci * fin_chunk, fin_chunk)
            a = acc_ref[:, pl.ds(start, fin_chunk), :] * inv_n   # (tc, fc, w)
            e = jnp.exp(a - m)
            s = s + jnp.sum(jnp.sum(e, axis=-1, keepdims=True),
                            axis=-2, keepdims=True)
            se = se + jnp.sum(jnp.sum(e * a, axis=-1, keepdims=True),
                              axis=-2, keepdims=True)
            return s, se

        zero = jnp.zeros((tc_, 1, 1), jnp.float32)
        s, se = lax.fori_loop(0, nchunks, body, (zero, zero))

        inv_s = pl.reciprocal(s, approx=False)
        ent_m = (m + jnp.log(s)) - se * inv_s                    # (tc, 1, 1)
        em = jnp.sum(ent_m, axis=0)                              # (1, 1)

        # Single unmasked write of the lane-dense (1, 3, 128) output block:
        # row 0 = sum ent_h, row 1 = sum ent_w, row 2 = sum ent_m.
        col = lax.broadcasted_iota(jnp.int32, o_ref.shape, 1)
        o_ref[...] = (jnp.where(col == 0, hsum_ref[...], 0.0)
                      + jnp.where(col == 1, wsum_ref[...], 0.0)
                      + jnp.where(col == 2, em, 0.0))


def _tpu_vmem_capacity_bytes(default=64 << 20):
    try:
        info = pltpu.get_tpu_info()
    except Exception:
        return default
    for name in ("vmem_capacity_bytes", "vmem_bytes", "vmem_size_bytes"):
        v = getattr(info, name, None)
        if v:
            return int(v)
    return default


def extent_loss(x):
    """x: (n, c, h, w) float array. Returns scalar loss (reduction='mean')."""
    n, c, h, w = x.shape
    hw = h * w
    isz = jnp.dtype(x.dtype).itemsize
    ph = -(-h // 8) * 8          # padded sublane extent
    pw = -(-w // 128) * 128      # padded lane extent

    # Generation-aware VMEM budget: ~24 MiB on v7x (64 MiB physical),
    # ~48 MiB on v5e/v6e (128 MiB physical).
    phys = _tpu_vmem_capacity_bytes()
    budget = int(min(max(phys * 3 // 8, 16 << 20), 48 << 20))
    cap = int(max(min(phys - (8 << 20), 100 << 20), 16 << 20))

    # finalize h-chunk: largest divisor of h that is <= 8
    fc = 1
    for d in range(min(8, h), 0, -1):
        if h % d == 0:
            fc = d
            break

    def need_bytes(tc, tn):
        blk = tc * ph * pw                     # padded elements per channel tile
        return (2 * tn * blk * isz             # double-buffered input block
                + blk * 4                      # f32 batch-sum accumulator
                + 2 * blk * 4                  # running f32 partial + cast slice
                + 3 * tc * fc * pw * 4         # chunked-finalize temporaries
                + (2 << 20))                   # output, (1,1) scratch, slack

    # Channel tile: largest divisor of c that fits (with tn=1), keeping >= 2
    # channel tiles so both v7x TensorCores get work on the parallel axis.
    tc = 1
    for d in range(c, 0, -1):
        if c % d:
            continue
        if c >= 2 and c // d < 2:
            continue
        if need_bytes(d, 1) <= budget:
            tc = d
            break
    nct = c // tc

    # Batch tile: grow the per-step DMA block toward ~4 MiB to amortize the
    # per-grid-step overhead (capped so the in-kernel unrolled sum stays short).
    tn = 1
    for d in range(1, n + 1):
        if n % d:
            continue
        if d > 64 or need_bytes(tc, d) > budget:
            break
        tn = d
        if d * tc * h * w * isz >= (4 << 20):
            break

    need = need_bytes(tc, tn)
    vmem_limit = int(min(cap, max(need + need // 4, 8 << 20)))

    cost = pl.CostEstimate(
        flops=5 * n * c * hw + 8 * c * hw,
        transcendentals=n * c * (h + w) + c * hw,
        bytes_accessed=n * c * hw * isz + nct * 3 * 128 * 4,
    )

    kernel = functools.partial(_extent_loss_kernel,
                               n_batch=n, tn=tn, fin_chunk=fc)
    out = pl.pallas_call(
        kernel,
        out_shape=jax.ShapeDtypeStruct((nct, 3, 128), jnp.float32),
        grid_spec=pltpu.PrefetchScalarGridSpec(
            num_scalar_prefetch=0,
            grid=(nct, n // tn),
            in_specs=[pl.BlockSpec((tn, tc, h, w),
                                   lambda ci, ni: (ni, ci, 0, 0))],
            out_specs=pl.BlockSpec((1, 3, 128),
                                   lambda ci, ni: (ci, 0, 0)),
            scratch_shapes=[pltpu.VMEM((tc, h, w), jnp.float32),   # batch sum
                            pltpu.VMEM((1, 1), jnp.float32),       # sum ent_h
                            pltpu.VMEM((1, 1), jnp.float32)],      # sum ent_w
        ),
        compiler_params=pltpu.CompilerParams(
            dimension_semantics=("parallel", "arbitrary"),
            vmem_limit_bytes=vmem_limit,
        ),
        cost_estimate=cost,
    )(x)

    parts = out[:, :, 0]                        # (nct, 3) partial sums
    sh = jnp.sum(parts[:, 0])
    sw = jnp.sum(parts[:, 1])
    sm = jnp.sum(parts[:, 2])
    return (sh + sw) / (n * c * hw) - sm / (c * hw)


# ------------------------- pure-JAX reference -------------------------------
def _extention_ref(t):
    b, k, d = t.shape
    a = t / 4.0
    a = jnp.stack((a, a, a, a), axis=-1)
    return a.reshape(b, k, -1)


def extent_loss_ref(x):
    n, c, h, w = x.shape
    x_h = _extention_ref(jnp.max(x, axis=-1))
    x_w = _extention_ref(jnp.max(x, axis=-2))

    def ent(v):
        P = jax.nn.softmax(v, axis=2)
        logP = jax.nn.log_softmax(v, axis=2)
        return jnp.mean(-jnp.sum(P * logP, axis=2) / (h * w))

    ent_h = ent(x_h)
    ent_w = ent(x_w)

    x_m = jnp.mean(x.reshape(n, c, -1), axis=0)
    P_m = jax.nn.softmax(x_m, axis=-1)
    logP_m = jax.nn.log_softmax(x_m, axis=-1)
    ent_m = jnp.mean(-jnp.sum(P_m * logP_m, axis=-1) / (h * w))
    return ent_h + ent_w - ent_m


if __name__ == "__main__":
    key = jax.random.PRNGKey(0)
    x = jax.random.normal(key, (2, 4, 16, 16), dtype=jnp.float32)

    loss = extent_loss(x)
    jax.block_until_ready(loss)

    ref = extent_loss_ref(x)
    assert jnp.allclose(loss, ref, rtol=1e-5, atol=1e-5), (loss, ref)
    print("KERNEL_OK")
</pallas_src>

<mosaic_0001>
module attributes {stable_mosaic.version = 11 : i64} {
  func.func @_extent_loss_kernel(%arg0: i32, %arg1: i32, %arg2: memref<2x2x16x16xf32, #tpu.memory_space<vmem>>, %arg3: memref<1x3x128xf32, #tpu.memory_space<vmem>>, %arg4: memref<2x16x16xf32, #tpu.memory_space<vmem>>, %arg5: memref<1x1xf32, #tpu.memory_space<vmem>>, %arg6: memref<1x1xf32, #tpu.memory_space<vmem>>) attributes {dimension_semantics = [#tpu.dimension_semantics<parallel>, #tpu.dimension_semantics<arbitrary>], iteration_bounds = array<i64: 2, 1>, scalar_prefetch = 0 : i64, scratch_operands = 3 : i64, tpu.core_type = #tpu.core_type<tc>, window_params = [{transform_indices = @transform_0, window_bounds = array<i64: 2, 2, 16, 16>}, {transform_indices = @transform_1, window_bounds = array<i64: 1, 3, 128>}]} {
    %c0 = arith.constant 0 : index
    %c0_0 = arith.constant 0 : index
    %c0_1 = arith.constant 0 : index
    %c0_2 = arith.constant 0 : index
    %0 = vector.load %arg2[%c0, %c0_0, %c0_1, %c0_2] : memref<2x2x16x16xf32, #tpu.memory_space<vmem>>, vector<2x2x16x16xf32>
    %1 = vector.extract_strided_slice %0 {offsets = [0, 0, 0, 0], sizes = [1, 2, 16, 16], strides = [1, 1, 1, 1]} : vector<2x2x16x16xf32> to vector<1x2x16x16xf32>
    %2 = vector.shape_cast %1 : vector<1x2x16x16xf32> to vector<2x16x16xf32>
    %3 = vector.extract_strided_slice %0 {offsets = [1, 0, 0, 0], sizes = [1, 2, 16, 16], strides = [1, 1, 1, 1]} : vector<2x2x16x16xf32> to vector<1x2x16x16xf32>
    %4 = vector.shape_cast %3 : vector<1x2x16x16xf32> to vector<2x16x16xf32>
    %5 = arith.addf %2, %4 : vector<2x16x16xf32>
    %cst = arith.constant dense<0xFF800000> : vector<2x2x16xf32>
    %6 = vector.multi_reduction <maximumf>, %0, %cst [3] : vector<2x2x16x16xf32> to vector<2x2x16xf32>
    %cst_3 = arith.constant dense<0xFF800000> : vector<2x2x16xf32>
    %7 = vector.multi_reduction <maximumf>, %0, %cst_3 [2] : vector<2x2x16x16xf32> to vector<2x2x16xf32>
    %cst_4 = arith.constant 2.500000e-01 : f32
    %8 = vector.broadcast %cst_4 : f32 to vector<2x2x16xf32>
    %9 = arith.mulf %6, %8 : vector<2x2x16xf32>
    %cst_5 = arith.constant dense<0xFF800000> : vector<2x2xf32>
    %10 = vector.multi_reduction <maximumf>, %9, %cst_5 [2] : vector<2x2x16xf32> to vector<2x2xf32>
    %11 = vector.shape_cast %10 : vector<2x2xf32> to vector<2x2x1xf32>
    %12 = vector.broadcast %11 : vector<2x2x1xf32> to vector<2x2x16xf32>
    %13 = arith.subf %9, %12 : vector<2x2x16xf32>
    %14 = math.exp %13 : vector<2x2x16xf32>
    %cst_6 = arith.constant dense<0.000000e+00> : vector<2x2xf32>
    %15 = vector.multi_reduction <add>, %14, %cst_6 [2] : vector<2x2x16xf32> to vector<2x2xf32>
    %16 = vector.shape_cast %15 : vector<2x2xf32> to vector<2x2x1xf32>
    %17 = arith.mulf %14, %9 : vector<2x2x16xf32>
    %cst_7 = arith.constant dense<0.000000e+00> : vector<2x2xf32>
    %18 = vector.multi_reduction <add>, %17, %cst_7 [2] : vector<2x2x16xf32> to vector<2x2xf32>
    %19 = vector.shape_cast %18 : vector<2x2xf32> to vector<2x2x1xf32>
    %20 = tpu.reciprocal %16 : vector<2x2x1xf32> -> vector<2x2x1xf32>
    %cst_8 = arith.constant 4.000000e+00 : f32
    %21 = vector.broadcast %cst_8 : f32 to vector<2x2x1xf32>
    %22 = arith.mulf %21, %16 : vector<2x2x1xf32>
    %23 = math.log %22 : vector<2x2x1xf32>
    %24 = arith.addf %11, %23 : vector<2x2x1xf32>
    %25 = arith.mulf %19, %20 : vector<2x2x1xf32>
    %26 = arith.subf %24, %25 : vector<2x2x1xf32>
    %cst_9 = arith.constant dense<0.000000e+00> : vector<2x1xf32>
    %27 = vector.multi_reduction <add>, %26, %cst_9 [0] : vector<2x2x1xf32> to vector<2x1xf32>
    %cst_10 = arith.constant dense<0.000000e+00> : vector<1xf32>
    %28 = vector.multi_reduction <add>, %27, %cst_10 [0] : vector<2x1xf32> to vector<1xf32>
    %29 = vector.shape_cast %28 : vector<1xf32> to vector<1x1xf32>
    %cst_11 = arith.constant 2.500000e-01 : f32
    %30 = vector.broadcast %cst_11 : f32 to vector<2x2x16xf32>
    %31 = arith.mulf %7, %30 : vector<2x2x16xf32>
    %cst_12 = arith.constant dense<0xFF800000> : vector<2x2xf32>
    %32 = vector.multi_reduction <maximumf>, %31, %cst_12 [2] : vector<2x2x16xf32> to vector<2x2xf32>
    %33 = vector.shape_cast %32 : vector<2x2xf32> to vector<2x2x1xf32>
    %34 = vector.broadcast %33 : vector<2x2x1xf32> to vector<2x2x16xf32>
    %35 = arith.subf %31, %34 : vector<2x2x16xf32>
    %36 = math.exp %35 : vector<2x2x16xf32>
    %cst_13 = arith.constant dense<0.000000e+00> : vector<2x2xf32>
    %37 = vector.multi_reduction <add>, %36, %cst_13 [2] : vector<2x2x16xf32> to vector<2x2xf32>
    %38 = vector.shape_cast %37 : vector<2x2xf32> to vector<2x2x1xf32>
    %39 = arith.mulf %36, %31 : vector<2x2x16xf32>
    %cst_14 = arith.constant dense<0.000000e+00> : vector<2x2xf32>
    %40 = vector.multi_reduction <add>, %39, %cst_14 [2] : vector<2x2x16xf32> to vector<2x2xf32>
    %41 = vector.shape_cast %40 : vector<2x2xf32> to vector<2x2x1xf32>
    %42 = tpu.reciprocal %38 : vector<2x2x1xf32> -> vector<2x2x1xf32>
    %cst_15 = arith.constant 4.000000e+00 : f32
    %43 = vector.broadcast %cst_15 : f32 to vector<2x2x1xf32>
    %44 = arith.mulf %43, %38 : vector<2x2x1xf32>
    %45 = math.log %44 : vector<2x2x1xf32>
    %46 = arith.addf %33, %45 : vector<2x2x1xf32>
    %47 = arith.mulf %41, %42 : vector<2x2x1xf32>
    %48 = arith.subf %46, %47 : vector<2x2x1xf32>
    %cst_16 = arith.constant dense<0.000000e+00> : vector<2x1xf32>
    %49 = vector.multi_reduction <add>, %48, %cst_16 [0] : vector<2x2x1xf32> to vector<2x1xf32>
    %cst_17 = arith.constant dense<0.000000e+00> : vector<1xf32>
    %50 = vector.multi_reduction <add>, %49, %cst_17 [0] : vector<2x1xf32> to vector<1xf32>
    %51 = vector.shape_cast %50 : vector<1xf32> to vector<1x1xf32>
    %c0_i32 = arith.constant 0 : i32
    %52 = arith.cmpi eq, %arg1, %c0_i32 : i32
    %53 = arith.extui %52 : i1 to i32
    %c0_i32_18 = arith.constant 0 : i32
    %54 = arith.cmpi ne, %53, %c0_i32_18 : i32
    scf.if %54 {
      %c0_23 = arith.constant 0 : index
      %c0_24 = arith.constant 0 : index
      %c0_25 = arith.constant 0 : index
      %61 = vector.load %arg4[%c0_23, %c0_24, %c0_25] : memref<2x16x16xf32, #tpu.memory_space<vmem>>, vector<2x16x16xf32>
      tpu.vector_store %arg4[%c0_23, %c0_24, %c0_25], %5 {strides = array<i32>} : memref<2x16x16xf32, #tpu.memory_space<vmem>>, vector<2x16x16xf32>,
      %c0_26 = arith.constant 0 : index
      %c0_27 = arith.constant 0 : index
      %62 = vector.load %arg5[%c0_26, %c0_27] : memref<1x1xf32, #tpu.memory_space<vmem>>, vector<1x1xf32>
      tpu.vector_store %arg5[%c0_26, %c0_27], %29 {strides = array<i32>} : memref<1x1xf32, #tpu.memory_space<vmem>>, vector<1x1xf32>,
      %c0_28 = arith.constant 0 : index
      %c0_29 = arith.constant 0 : index
      %63 = vector.load %arg6[%c0_28, %c0_29] : memref<1x1xf32, #tpu.memory_space<vmem>>, vector<1x1xf32>
      tpu.vector_store %arg6[%c0_28, %c0_29], %51 {strides = array<i32>} : memref<1x1xf32, #tpu.memory_space<vmem>>, vector<1x1xf32>,
    } else {
    }
    %c0_i32_19 = arith.constant 0 : i32
    %55 = arith.cmpi sgt, %arg1, %c0_i32_19 : i32
    %56 = arith.extui %55 : i1 to i32
    %c0_i32_20 = arith.constant 0 : i32
    %57 = arith.cmpi ne, %56, %c0_i32_20 : i32
    scf.if %57 {
      %c0_23 = arith.constant 0 : index
      %c0_24 = arith.constant 0 : index
      %c0_25 = arith.constant 0 : index
      %61 = vector.load %arg4[%c0_23, %c0_24, %c0_25] : memref<2x16x16xf32, #tpu.memory_space<vmem>>, vector<2x16x16xf32>
      %62 = arith.addf %61, %5 : vector<2x16x16xf32>
      %c0_26 = arith.constant 0 : index
      %c0_27 = arith.constant 0 : index
      %c0_28 = arith.constant 0 : index
      %63 = vector.load %arg4[%c0_26, %c0_27, %c0_28] : memref<2x16x16xf32, #tpu.memory_space<vmem>>, vector<2x16x16xf32>
      tpu.vector_store %arg4[%c0_26, %c0_27, %c0_28], %62 {strides = array<i32>} : memref<2x16x16xf32, #tpu.memory_space<vmem>>, vector<2x16x16xf32>,
      %c0_29 = arith.constant 0 : index
      %c0_30 = arith.constant 0 : index
      %64 = vector.load %arg5[%c0_29, %c0_30] : memref<1x1xf32, #tpu.memory_space<vmem>>, vector<1x1xf32>
      %65 = arith.addf %64, %29 : vector<1x1xf32>
      %c0_31 = arith.constant 0 : index
      %c0_32 = arith.constant 0 : index
      %66 = vector.load %arg5[%c0_31, %c0_32] : memref<1x1xf32, #tpu.memory_space<vmem>>, vector<1x1xf32>
      tpu.vector_store %arg5[%c0_31, %c0_32], %65 {strides = array<i32>} : memref<1x1xf32, #tpu.memory_space<vmem>>, vector<1x1xf32>,
      %c0_33 = arith.constant 0 : index
      %c0_34 = arith.constant 0 : index
      %67 = vector.load %arg6[%c0_33, %c0_34] : memref<1x1xf32, #tpu.memory_space<vmem>>, vector<1x1xf32>
      %68 = arith.addf %67, %51 : vector<1x1xf32>
      %c0_35 = arith.constant 0 : index
      %c0_36 = arith.constant 0 : index
      %69 = vector.load %arg6[%c0_35, %c0_36] : memref<1x1xf32, #tpu.memory_space<vmem>>, vector<1x1xf32>
      tpu.vector_store %arg6[%c0_35, %c0_36], %68 {strides = array<i32>} : memref<1x1xf32, #tpu.memory_space<vmem>>, vector<1x1xf32>,
    } else {
    }
    %c0_i32_21 = arith.constant 0 : i32
    %58 = arith.cmpi eq, %arg1, %c0_i32_21 : i32
    %59 = arith.extui %58 : i1 to i32
    %c0_i32_22 = arith.constant 0 : i32
    %60 = arith.cmpi ne, %59, %c0_i32_22 : i32
    scf.if %60 {
      %c0_23 = arith.constant 0 : index
      %c0_24 = arith.constant 0 : index
      %c0_25 = arith.constant 0 : index
      %61 = vector.load %arg4[%c0_23, %c0_24, %c0_25] : memref<2x16x16xf32, #tpu.memory_space<vmem>>, vector<2x16x16xf32>
      %cst_26 = arith.constant dense<0xFF800000> : vector<2x16xf32>
      %62 = vector.multi_reduction <maximumf>, %61, %cst_26 [2] : vector<2x16x16xf32> to vector<2x16xf32>
      %63 = vector.shape_cast %62 : vector<2x16xf32> to vector<2x16x1xf32>
      %cst_27 = arith.constant dense<0xFF800000> : vector<2x1xf32>
      %64 = vector.multi_reduction <maximumf>, %63, %cst_27 [1] : vector<2x16x1xf32> to vector<2x1xf32>
      %65 = vector.shape_cast %64 : vector<2x1xf32> to vector<2x1x1xf32>
      %cst_28 = arith.constant 5.000000e-01 : f32
      %66 = vector.broadcast %cst_28 : f32 to vector<2x1x1xf32>
      %67 = arith.mulf %65, %66 : vector<2x1x1xf32>
      %cst_29 = arith.constant 0.000000e+00 : f32
      %68 = vector.broadcast %cst_29 : f32 to vector<2x1x1xf32>
      %cst_30 = arith.constant 5.000000e-01 : f32
      %c0_i32_31 = arith.constant 0 : i32
      %c2_i32 = arith.constant 2 : i32
      %69 = arith.addi %c0_i32_31, %c2_i32 : i32
      %c1_i32 = arith.constant 1 : i32
      %70:2 = scf.for %arg7 = %c0_i32_31 to %69 step %c1_i32 iter_args(%arg8 = %68, %arg9 = %68) -> (vector<2x1x1xf32>, vector<2x1x1xf32>)  : i32 {
        %c8_i32 = arith.constant 8 : i32
        %101 = arith.muli %arg7, %c8_i32 : i32
        %102 = tpu.assume_multiple %101, 8 : i32
        %c0_47 = arith.constant 0 : index
        %103 = arith.index_cast %102 : i32 to index
        %c0_48 = arith.constant 0 : index
        %104 = vector.load %arg4[%c0_47, %103, %c0_48] : memref<2x16x16xf32, #tpu.memory_space<vmem>>, vector<2x8x16xf32>
        %105 = vector.broadcast %cst_30 : f32 to vector<2x8x16xf32>
        %106 = arith.mulf %104, %105 : vector<2x8x16xf32>
        %107 = vector.broadcast %67 : vector<2x1x1xf32> to vector<2x8x16xf32>
        %108 = arith.subf %106, %107 : vector<2x8x16xf32>
        %109 = math.exp %108 : vector<2x8x16xf32>
        %cst_49 = arith.constant dense<0.000000e+00> : vector<2x8xf32>
        %110 = vector.multi_reduction <add>, %109, %cst_49 [2] : vector<2x8x16xf32> to vector<2x8xf32>
        %111 = vector.shape_cast %110 : vector<2x8xf32> to vector<2x8x1xf32>
        %cst_50 = arith.constant dense<0.000000e+00> : vector<2x1xf32>
        %112 = vector.multi_reduction <add>, %111, %cst_50 [1] : vector<2x8x1xf32> to vector<2x1xf32>
        %113 = vector.shape_cast %112 : vector<2x1xf32> to vector<2x1x1xf32>
        %114 = arith.addf %arg8, %113 : vector<2x1x1xf32>
        %115 = arith.mulf %109, %106 : vector<2x8x16xf32>
        %cst_51 = arith.constant dense<0.000000e+00> : vector<2x8xf32>
        %116 = vector.multi_reduction <add>, %115, %cst_51 [2] : vector<2x8x16xf32> to vector<2x8xf32>
        %117 = vector.shape_cast %116 : vector<2x8xf32> to vector<2x8x1xf32>
        %cst_52 = arith.constant dense<0.000000e+00> : vector<2x1xf32>
        %118 = vector.multi_reduction <add>, %117, %cst_52 [1] : vector<2x8x1xf32> to vector<2x1xf32>
        %119 = vector.shape_cast %118 : vector<2x1xf32> to vector<2x1x1xf32>
        %120 = arith.addf %arg9, %119 : vector<2x1x1xf32>
        scf.yield %114, %120 : vector<2x1x1xf32>, vector<2x1x1xf32>
      }
      %c2_i32_32 = arith.constant 2 : i32
      %71 = tpu.reciprocal %70#0 : vector<2x1x1xf32> -> vector<2x1x1xf32>
      %72 = math.log %70#0 : vector<2x1x1xf32>
      %73 = arith.addf %67, %72 : vector<2x1x1xf32>
      %74 = arith.mulf %70#1, %71 : vector<2x1x1xf32>
      %75 = arith.subf %73, %74 : vector<2x1x1xf32>
      %cst_33 = arith.constant dense<0.000000e+00> : vector<1x1xf32>
      %76 = vector.multi_reduction <add>, %75, %cst_33 [0] : vector<2x1x1xf32> to vector<1x1xf32>
      %77 = tpu.iota {dimensions = array<i32: 1>} : vector<1x3x128xi32>
      %c0_i32_34 = arith.constant 0 : i32
      %78 = vector.broadcast %c0_i32_34 : i32 to vector<1x3x128xi32>
      %79 = arith.cmpi eq, %77, %78 : vector<1x3x128xi32>
      %c0_35 = arith.constant 0 : index
      %c0_36 = arith.constant 0 : index
      %80 = vector.load %arg5[%c0_35, %c0_36] : memref<1x1xf32, #tpu.memory_space<vmem>>, vector<1x1xf32>
      %cst_37 = arith.constant 0.000000e+00 : f32
      %81 = vector.shape_cast %80 : vector<1x1xf32> to vector<1x1x1xf32>
      %82 = vector.broadcast %81 : vector<1x1x1xf32> to vector<1x3x128xf32>
      %83 = vector.broadcast %cst_37 : f32 to vector<1x3x128xf32>
      %84 = arith.select %79, %82, %83 : vector<1x3x128xi1>, vector<1x3x128xf32>
      %c1_i32_38 = arith.constant 1 : i32
      %85 = vector.broadcast %c1_i32_38 : i32 to vector<1x3x128xi32>
      %86 = arith.cmpi eq, %77, %85 : vector<1x3x128xi32>
      %c0_39 = arith.constant 0 : index
      %c0_40 = arith.constant 0 : index
      %87 = vector.load %arg6[%c0_39, %c0_40] : memref<1x1xf32, #tpu.memory_space<vmem>>, vector<1x1xf32>
      %cst_41 = arith.constant 0.000000e+00 : f32
      %88 = vector.shape_cast %87 : vector<1x1xf32> to vector<1x1x1xf32>
      %89 = vector.broadcast %88 : vector<1x1x1xf32> to vector<1x3x128xf32>
      %90 = vector.broadcast %cst_41 : f32 to vector<1x3x128xf32>
      %91 = arith.select %86, %89, %90 : vector<1x3x128xi1>, vector<1x3x128xf32>
      %92 = arith.addf %84, %91 : vector<1x3x128xf32>
      %c2_i32_42 = arith.constant 2 : i32
      %93 = vector.broadcast %c2_i32_42 : i32 to vector<1x3x128xi32>
      %94 = arith.cmpi eq, %77, %93 : vector<1x3x128xi32>
      %cst_43 = arith.constant 0.000000e+00 : f32
      %95 = vector.shape_cast %76 : vector<1x1xf32> to vector<1x1x1xf32>
      %96 = vector.broadcast %95 : vector<1x1x1xf32> to vector<1x3x128xf32>
      %97 = vector.broadcast %cst_43 : f32 to vector<1x3x128xf32>
      %98 = arith.select %94, %96, %97 : vector<1x3x128xi1>, vector<1x3x128xf32>
      %99 = arith.addf %92, %98 : vector<1x3x128xf32>
      %c0_44 = arith.constant 0 : index
      %c0_45 = arith.constant 0 : index
      %c0_46 = arith.constant 0 : index
      %100 = vector.load %arg3[%c0_44, %c0_45, %c0_46] : memref<1x3x128xf32, #tpu.memory_space<vmem>>, vector<1x3x128xf32>
      tpu.vector_store %arg3[%c0_44, %c0_45, %c0_46], %99 {strides = array<i32>} : memref<1x3x128xf32, #tpu.memory_space<vmem>>, vector<1x3x128xf32>,
    } else {
    }
    return
  }
  func.func @transform_0(%arg0: i32, %arg1: i32) -> (i32, i32, i32, i32) {
    %c0_i32 = arith.constant 0 : i32
    %c0_i32_0 = arith.constant 0 : i32
    %c0_i32_1 = arith.constant 0 : i32
    return %arg1, %arg0, %c0_i32, %c0_i32_0 : i32, i32, i32, i32
  }
  func.func @transform_1(%arg0: i32, %arg1: i32) -> (i32, i32, i32) {
    %c0_i32 = arith.constant 0 : i32
    %c0_i32_0 = arith.constant 0 : i32
    %c0_i32_1 = arith.constant 0 : i32
    return %arg0, %c0_i32, %c0_i32_0 : i32, i32, i32
  }
}

</mosaic_0001>

<llo_original>
// kernel: tpu_custom_call.1
$region0: #{tpu_custom_call.1}
  #allocation0 [shape = 'u32[]', space=smem, size = 0x4, offset = 0x4, fixed_abs, tag = 'smem constant byte address 0x4 - core index']
  #allocation1 [shape = 'u32[144,128]{1,0:T(1,128)}', space=vmem, size = 0x12000, scoped, tag = 'internal scratch']
  #allocation2 [shape = 'f32[2,16,16]{2,1,0:T(8,128)}', space=vmem, size = 0x4000, scoped, tag = 'scratch operand']
  #allocation3 [shape = 'f32[1,1]{1,0:T(1,128)}', space=vmem, size = 0x200, scoped, tag = 'scratch operand']
  #allocation4 [shape = 'f32[1,1]{1,0:T(1,128)}', space=vmem, size = 0x200, scoped, tag = 'scratch operand']
  #allocation7 [shape = 's32[]', space=sflag, size = 0x4, offset = 0, fixed_abs, tag = 'sflag constant byte address 0x0 - dummy sync flag']
  %s0 = inlined_call_operand.hbm [shape: f32[2,4,16,16], index: 0, kind: input, shape index: {}]
  %s1 = inlined_call_operand.vmem [shape: f32[2,3,128], index: 1, kind: output, shape index: {}]
  %s2 = sld [smem:[#allocation0]]
  $region60: #{tpu_custom_call.1} parent=0
    _
  %s4 = ssub.s32 1, %s2
  %s5 = scalar_select 0, %s4, %s2
  $region1: #{tpu_custom_call.1} parent=0
    #allocation5 [shape = 'u8[65536]{0}', space=vmem, size = 0x10000, scoped, tag = 'input window, operand 0']
    #allocation6 [shape = 's32[2]{0}', space=sflag, size = 0x8, scoped, tag = 'scoped memory for tpu_custom_call.1']
    %6 = vsyncpa [#allocation6], 0
    %s7 = scalar_lea.sflag [#allocation6], 1
    %8 = vsyncpa %s7, 0
    loop: start=0, step=1, limit=4
    $region2: #{tpu_custom_call.1} parent=1 // loop_pre_header
      _
    $region3: #{tpu_custom_call.1} parent=1 // loop_header
      %s10 = sphi 0, %s14
      %p11 = scmp.ge.s32.totalorder %s10, 4
      %s17 = sphi 0, %s29
      %s18 = sphi 0, %s25
      %s19 = sphi 0, %s17
      %s20 = sphi 0, %s18
      %s21 = sphi 0, %s19
      %s22 = sphi 0, %s20
      %s34 = sphi 0, %s36
      %s37 = sphi 0, %s34
      %s38 = sphi 0, %s37
      %s54 = sphi 0, %s38
      %s60 = sphi 0, %s62
      %s63 = sphi 0, %s60
      %s64 = sphi 0, %s63
      %s80 = sphi 0, %s64
    $region4: #{tpu_custom_call.1} parent=1 // loop_header_branch
      %13 = sbr.rel (%p11) target = $region8
    $region5: #{tpu_custom_call.1} parent=1 // loop_body
      %s15 = ssub.s32 %s10, 1
      %s16 = ssub.s32 %s10, 2
      %s23 = sadd.s32 1, %s18
      %p24 = scmp.ge.s32.totalorder %s23, 1
      %s25 = scalar_select %p24, 0, %s23
      %s26 = sadd.s32 1, %s17
      %s27 = scalar_select %p24, %s26, %s17
      %p28 = scmp.ge.s32.totalorder %s27, 2
      %s29 = scalar_select %p28, 0, %s27
      %s30 = ssub.s32 %s18, %s25
      %s31 = ssub.s32 %s17, %s29
      %s32 = sor.u32 %s30, %s31
      %p33 = scmp.eq.s32.totalorder %s32, 0
      %s35 = sadd.s32 %s34, 1
      %s36 = scalar_select %p33, %s34, %s35
      %p39 = pneg %p33
      %p40 = scmp.eq.s32.totalorder %s10, 1
      %p41 = por %p39, %p40
      %p42 = scmp.ne.s32.totalorder %s34, %s37
      %p43 = scmp.eq.s32.totalorder %s10, 0
      %p44 = por %p42, %p43
      %p45 = scmp.ne.s32.totalorder %s34, %s37
      %p46 = scmp.eq.s32.totalorder %s15, 1
      %p47 = por %p45, %p46
      %p48 = scmp.ne.s32.totalorder %s37, %s38
      %p49 = scmp.eq.s32.totalorder %s15, 0
      %p50 = por %p48, %p49
      %p51 = scmp.ne.s32.totalorder %s37, %s38
      %p52 = scmp.eq.s32.totalorder %s16, 1
      %p53 = por %p51, %p52
      %p55 = scmp.ne.s32.totalorder %s38, %s54
      %p56 = scmp.eq.s32.totalorder %s16, 0
      %p57 = por %p55, %p56
      %s58 = ssub.s32 %s17, %s29
      %p59 = scmp.eq.s32.totalorder %s58, 0
      %s61 = sadd.s32 %s60, 1
      %s62 = scalar_select %p59, %s60, %s61
      %p65 = pneg %p59
      %p66 = scmp.eq.s32.totalorder %s10, 1
      %p67 = por %p65, %p66
      %p68 = scmp.ne.s32.totalorder %s60, %s63
      %p69 = scmp.eq.s32.totalorder %s10, 0
      %p70 = por %p68, %p69
      %p71 = scmp.ne.s32.totalorder %s60, %s63
      %p72 = scmp.eq.s32.totalorder %s15, 1
      %p73 = por %p71, %p72
      %p74 = scmp.ne.s32.totalorder %s63, %s64
      %p75 = scmp.eq.s32.totalorder %s15, 0
      %p76 = por %p74, %p75
      %p77 = scmp.ne.s32.totalorder %s63, %s64
      %p78 = scmp.eq.s32.totalorder %s16, 1
      %p79 = por %p77, %p78
      %p81 = scmp.ne.s32.totalorder %s64, %s80
      %p82 = scmp.eq.s32.totalorder %s16, 0
      %p83 = por %p81, %p82
      %p84 = scmp.le.s32.totalorder 1, %s10
      %p85 = scmp.lt.s32.totalorder %s10, 3
      %p86 = pnand %p84, %p85
      %p87 = pneg %p86
      // Predicated region
      $region9: #{tpu_custom_call.1} parent=5 // pred_check
        _
      $region10: #{tpu_custom_call.1} parent=5 // pred_check_branch
        %89 = sbr.rel (%p86) target = $region12
      $region11: #{tpu_custom_call.1} parent=5 // pred_region
        %s90 = ssub.s32 %s10, 1
      $region12: #{tpu_custom_call.1} parent=5 // pred_fallthru
        _
      %p91 = scmp.lt.s32.totalorder %s10, 2
      // Predicated region
      $region13: #{tpu_custom_call.1} parent=5 // pred_check
        %p92 = pneg %p91
      $region14: #{tpu_custom_call.1} parent=5 // pred_check_branch
        %94 = sbr.rel (%p92) target = $region16
      $region15: #{tpu_custom_call.1} parent=5 // pred_region
        // Predicated region
        $region17: #{tpu_custom_call.1} parent=15 // pred_check
          %p95 = pneg %p44
        $region18: #{tpu_custom_call.1} parent=15 // pred_check_branch
          %97 = sbr.rel (%p95) target = $region20
        $region19: #{tpu_custom_call.1} parent=15 // pred_region
          #allocation8 [shape = 'u32[6]{0}', space=smem, size = 0x18, scoped, tag = 'DMA stride descriptor']
          %s98 = sand.u32 %s34, 1
          %s99 = scalar_lea.sflag [#allocation6], %s98
          %s100 = sand.u32 %s34, 1
          %s101 = smul.addr %s100, 64
          %s102 = scalar_lea.vmem [#allocation5], %s101
          %s103 = smul.u32 2, %s18
          %s104 = smul.u32 2, %s17
          %s106 = ssub.s32 1024, 1024
          %107 = vsyncadd %s99, %s106
          %s108 = smul.addr %s104, 2
          %s109 = smul.addr %s103, 8
          %s110 = sadd.s32 %s108, %s109
          %s111 = smul.addr %s110, 128
          %s112 = scalar_lea.hbm %s0, %s111
          %s114 = sshll.u32 1, 14
          %s115 = sxor.u32 4294967295, %s114
          %s117 = sld [smem:[#allocation0]]
          %s118 = sadd.s32 2, %s117
          %s120 = sshll.u32 7, 26
          %s121 = sxor.u32 4294967295, %s120
          %s122 = sand.u32 0, %s121
          %s123 = sshll.u32 %s118, 26
          %s124 = sor.u32 %s122, %s123
          %s125 = sshll.u32 %s102, 4
          %s126 = int_to_ptr.vmem [resolvable:$true] %s125
          %132 = sst [smem:[#allocation8]] 1024
          %s133 = scalar_lea.smem [#allocation8], 1
          %134 = sst [smem:[%s133]] 512
          %s135 = scalar_lea.smem [#allocation8], 2
          %136 = sst [smem:[%s135]] 4
          %s137 = scalar_lea.smem [#allocation8], 3
          %138 = sst [smem:[%s137]] 128
          %s139 = scalar_lea.smem [#allocation8], 4
          %140 = sst [smem:[%s139]] 128
          %s141 = scalar_lea.smem [#allocation8], 5
          %142 = sst [smem:[%s141]] 8
          %144 = dma.general %s112, 1024, %s126, %s99, 131072, [#allocation8], %s124, 0
        $region20: #{tpu_custom_call.1} parent=15 // pred_fallthru
          _
      $region16: #{tpu_custom_call.1} parent=5 // pred_fallthru
        _
      %p145 = scmp.le.s32.totalorder 1, %s10
      %p146 = scmp.lt.s32.totalorder %s10, 3
      %p147 = pnand %p145, %p146
      %p148 = pneg %p147
      // Predicated region
      $region21: #{tpu_custom_call.1} parent=5 // pred_check
        _
      $region22: #{tpu_custom_call.1} parent=5 // pred_check_branch
        %150 = sbr.rel (%p147) target = $region24
      $region23: #{tpu_custom_call.1} parent=5 // pred_region
        %s151 = ssub.s32 %s10, 1
        %s152 = sand.u32 %s37, 1
        %s153 = scalar_lea.sflag [#allocation6], %s152
        %s154 = sand.u32 %s37, 1
        %s155 = smul.addr %s154, 64
        %s156 = scalar_lea.vmem [#allocation5], %s155
        // Predicated region
        $region25: #{tpu_custom_call.1} parent=23 // pred_check
          %p157 = pneg %p50
        $region26: #{tpu_custom_call.1} parent=23 // pred_check_branch
          %159 = sbr.rel (%p157) target = $region28
        $region27: #{tpu_custom_call.1} parent=23 // pred_region
          %160 = dma.done %s153, 1024
        $region28: #{tpu_custom_call.1} parent=23 // pred_fallthru
          _
        %s161 = sand.u32 %s37, 1
        %s162 = scalar_lea.sflag [#allocation6], %s161
        %s163 = sand.u32 %s37, 1
        %s164 = smul.addr %s163, 64
        %s165 = scalar_lea.vmem [#allocation5], %s164
        %p166 = pneg %p50
        %p167 = pneg %p47
        %p168 = pneg %p76
        %p169 = pneg %p73
        %p170 = scmp.lt.s32.totalorder %s19, 1
        %s171 = scalar_select %p170, %s19, 1
        %s172 = smul.addr %s171, 4
        %s173 = scalar_lea.vmem %s1, %s172
        %s174 = smul.u32 2, %s20
        %s175 = smul.u32 2, %s19
        %p176 = scmp.lt.s32.totalorder %s19, 1
        %s177 = scalar_select %p176, %s19, 1
        %s178 = smul.addr %s177, 4
        %s179 = scalar_lea.vmem %s1, %s178
        %v180 = vld [vmem:[%s156] sm:$0xff]
        %v181 = vld [vmem:[%s156 + $0x8] sm:$0xff]
        %v182 = vld [vmem:[%s156 + $0x10] sm:$0xff]
        %v183 = vld [vmem:[%s156 + $0x18] sm:$0xff]
        %v184 = vld [vmem:[%s156 + $0x20] sm:$0xff]
        %v185 = vld [vmem:[%s156 + $0x28] sm:$0xff]
        %v186 = vld [vmem:[%s156 + $0x30] sm:$0xff]
        %v187 = vld [vmem:[%s156 + $0x38] sm:$0xff]
        %v188 = vadd.f32 %v180, %v184
        %v189 = vadd.f32 %v181, %v185
        %v190 = vadd.f32 %v182, %v186
        %v191 = vadd.f32 %v183, %v187
        %vm192 = vcmask 130048
        %v193 = vsel %vm192, %v180, -inf
        %194 = vmax.xlane.f32.xlu0 %v193
        %v195 = vpop.xlane.xlu0 %194
        %v196 = vsel %vm192, %v181, -inf
        %197 = vmax.xlane.f32.xlu0 %v196
        %v198 = vpop.xlane.xlu0 %197
        %v199 = vsel %vm192, %v182, -inf
        %200 = vmax.xlane.f32.xlu0 %v199
        %v201 = vpop.xlane.xlu0 %200
        %v202 = vsel %vm192, %v183, -inf
        %203 = vmax.xlane.f32.xlu0 %v202
        %v204 = vpop.xlane.xlu0 %203
        %v205 = vsel %vm192, %v184, -inf
        %206 = vmax.xlane.f32.xlu0 %v205
        %v207 = vpop.xlane.xlu0 %206
        %v208 = vsel %vm192, %v185, -inf
        %209 = vmax.xlane.f32.xlu0 %v208
        %v210 = vpop.xlane.xlu0 %209
        %v211 = vsel %vm192, %v186, -inf
        %212 = vmax.xlane.f32.xlu0 %v211
        %v213 = vpop.xlane.xlu0 %212
        %v214 = vsel %vm192, %v187, -inf
        %215 = vmax.xlane.f32.xlu0 %v214
        %v216 = vpop.xlane.xlu0 %215
        %v217 = vmax.f32 %v193, %v196
        %v218 = vrot.slane %v217, 4
        %v219 = vmax.f32 %v217, %v218
        %v220 = vrot.slane %v219, 2
        %v221 = vmax.f32 %v219, %v220
        %v222 = vrot.slane %v221, 1
        %v223 = vmax.f32 %v221, %v222
        %v224 = vmax.f32 %v199, %v202
        %v225 = vrot.slane %v224, 4
        %v226 = vmax.f32 %v224, %v225
        %v227 = vrot.slane %v226, 2
        %v228 = vmax.f32 %v226, %v227
        %v229 = vrot.slane %v228, 1
        %v230 = vmax.f32 %v228, %v229
        %v231 = vmax.f32 %v205, %v208
        %v232 = vrot.slane %v231, 4
        %v233 = vmax.f32 %v231, %v232
        %v234 = vrot.slane %v233, 2
        %v235 = vmax.f32 %v233, %v234
        %v236 = vrot.slane %v235, 1
        %v237 = vmax.f32 %v235, %v236
        %v238 = vmax.f32 %v211, %v214
        %v239 = vrot.slane %v238, 4
        %v240 = vmax.f32 %v238, %v239
        %v241 = vrot.slane %v240, 2
        %v242 = vmax.f32 %v240, %v241
        %v243 = vrot.slane %v242, 1
        %v244 = vmax.f32 %v242, %v243
        %v245 = vmul.f32 %v195, 0.25
        %v246 = vmul.f32 %v198, 0.25
        %v247 = vmul.f32 %v201, 0.25
        %v248 = vmul.f32 %v204, 0.25
        %v249 = vmul.f32 %v207, 0.25
        %v250 = vmul.f32 %v210, 0.25
        %v251 = vmul.f32 %v213, 0.25
        %v252 = vmul.f32 %v216, 0.25
        %v261 = vlaneseq
        %v262 = vand.u32 %v261, 127
        %v263 = vlaneseq
        %v264 = vshrl.u32 %v263, 7
        %v265 = vsub.s32 %v262, %v264
        %v266 = vrot.slane %v245, %v265
        %v267 = vadd.s32 %v262, 4294967288
        %v268 = vlaneseq
        %v269 = vshrl.u32 %v268, 7
        %v270 = vsub.s32 %v267, %v269
        %v271 = vrot.slane %v246, %v270
        %vm272 = vcmask 130112
        %v273 = vsel %vm272, %v271, %v266
        %v274 = vlaneseq
        %v275 = vshrl.u32 %v274, 7
        %v276 = vsub.s32 %v262, %v275
        %v277 = vrot.slane %v247, %v276
        %v278 = vlaneseq
        %v279 = vshrl.u32 %v278, 7
        %v280 = vsub.s32 %v267, %v279
        %v281 = vrot.slane %v248, %v280
        %v282 = vsel %vm272, %v281, %v277
        %v283 = vlaneseq
        %v284 = vshrl.u32 %v283, 7
        %v285 = vsub.s32 %v262, %v284
        %v286 = vrot.slane %v249, %v285
        %v287 = vlaneseq
        %v288 = vshrl.u32 %v287, 7
        %v289 = vsub.s32 %v267, %v288
        %v290 = vrot.slane %v250, %v289
        %v291 = vsel %vm272, %v290, %v286
        %v292 = vlaneseq
        %v293 = vshrl.u32 %v292, 7
        %v294 = vsub.s32 %v262, %v293
        %v295 = vrot.slane %v251, %v294
        %v296 = vlaneseq
        %v297 = vshrl.u32 %v296, 7
        %v298 = vsub.s32 %v267, %v297
        %v299 = vrot.slane %v252, %v298
        %v300 = vsel %vm272, %v299, %v295
        %vm301 = vcmask 1041409
        %v302 = vsel %vm301, %v282, %v273
        %v303 = vsel %vm301, %v300, %v291
        %vm306 = vcmask 123904
        %v307 = vsel %vm306, %v302, -inf
        %308 = vmax.xlane.f32.xlu0 %v307
        %v309 = vpop.xlane.xlu0 %308
        %v310 = vsel %vm306, %v303, -inf
        %311 = vmax.xlane.f32.xlu0 %v310
        %v312 = vpop.xlane.xlu0 %311
        %v315 = vlaneseq
        %v316 = vshrl.u32 %v315, 7
        %v317 = vsub.s32 0, %v316
        %v318 = vrot.slane %v309, %v317
        %v319 = vlaneseq
        %v320 = vshrl.u32 %v319, 7
        %v321 = vsub.s32 1, %v320
        %v322 = vrot.slane %v309, %v321
        %v323 = vlaneseq
        %v324 = vshrl.u32 %v323, 7
        %v325 = vsub.s32 0, %v324
        %v326 = vrot.slane %v312, %v325
        %v327 = vlaneseq
        %v328 = vshrl.u32 %v327, 7
        %v329 = vsub.s32 1, %v328
        %v330 = vrot.slane %v312, %v329
        %v335 = vsub.f32 %v245, %v318
        %v336 = vsub.f32 %v246, %v318
        %v337 = vsub.f32 %v247, %v322
        %v338 = vsub.f32 %v248, %v322
        %v339 = vsub.f32 %v249, %v326
        %v340 = vsub.f32 %v250, %v326
        %v341 = vsub.f32 %v251, %v330
        %v342 = vsub.f32 %v252, %v330
        %v343 = vmul.f32 %v335, 1.442695
        %v344 = vpow.pop %v343
        %v345 = vmul.f32 %v336, 1.442695
        %v346 = vpow.pop %v345
        %v347 = vmul.f32 %v337, 1.442695
        %v348 = vpow.pop %v347
        %v349 = vmul.f32 %v338, 1.442695
        %v350 = vpow.pop %v349
        %v351 = vmul.f32 %v339, 1.442695
        %v352 = vpow.pop %v351
        %v353 = vmul.f32 %v340, 1.442695
        %v354 = vpow.pop %v353
        %v355 = vmul.f32 %v341, 1.442695
        %v356 = vpow.pop %v355
        %v357 = vmul.f32 %v342, 1.442695
        %v358 = vpow.pop %v357
        %367 = vset.pattern.permute.xlu0 0
        %368 = vperm.xlu0 %367, %v344
        %v369 = vpop.permute.xlu0 %368
        %370 = vset.pattern.permute.xlu0 0
        %371 = vperm.xlu0 %370, %v346
        %v372 = vpop.permute.xlu0 %371
        %373 = vset.pattern.permute.xlu0 0
        %374 = vperm.xlu0 %373, %v348
        %v375 = vpop.permute.xlu0 %374
        %376 = vset.pattern.permute.xlu0 0
        %377 = vperm.xlu0 %376, %v350
        %v378 = vpop.permute.xlu0 %377
        %379 = vset.pattern.permute.xlu0 0
        %380 = vperm.xlu0 %379, %v352
        %v381 = vpop.permute.xlu0 %380
        %382 = vset.pattern.permute.xlu0 0
        %383 = vperm.xlu0 %382, %v354
        %v384 = vpop.permute.xlu0 %383
        %385 = vset.pattern.permute.xlu0 0
        %386 = vperm.xlu0 %385, %v356
        %v387 = vpop.permute.xlu0 %386
        %388 = vset.pattern.permute.xlu0 0
        %389 = vperm.xlu0 %388, %v358
        %v390 = vpop.permute.xlu0 %389
        %v391 = vlaneseq
        %v392 = vshrl.u32 %v391, 7
        %v393 = vsub.s32 %v262, %v392
        %v394 = vrot.slane %v369, %v393
        %v395 = vlaneseq
        %v396 = vshrl.u32 %v395, 7
        %v397 = vsub.s32 %v267, %v396
        %v398 = vrot.slane %v372, %v397
        %v399 = vsel %vm272, %v398, %v394
        %v400 = vlaneseq
        %v401 = vshrl.u32 %v400, 7
        %v402 = vsub.s32 %v262, %v401
        %v403 = vrot.slane %v375, %v402
        %v404 = vlaneseq
        %v405 = vshrl.u32 %v404, 7
        %v406 = vsub.s32 %v267, %v405
        %v407 = vrot.slane %v378, %v406
        %v408 = vsel %vm272, %v407, %v403
        %v409 = vlaneseq
        %v410 = vshrl.u32 %v409, 7
        %v411 = vsub.s32 %v262, %v410
        %v412 = vrot.slane %v381, %v411
        %v413 = vlaneseq
        %v414 = vshrl.u32 %v413, 7
        %v415 = vsub.s32 %v267, %v414
        %v416 = vrot.slane %v384, %v415
        %v417 = vsel %vm272, %v416, %v412
        %v418 = vlaneseq
        %v419 = vshrl.u32 %v418, 7
        %v420 = vsub.s32 %v262, %v419
        %v421 = vrot.slane %v387, %v420
        %v422 = vlaneseq
        %v423 = vshrl.u32 %v422, 7
        %v424 = vsub.s32 %v267, %v423
        %v425 = vrot.slane %v390, %v424
        %v426 = vsel %vm272, %v425, %v421
        %v427 = vsel %vm301, %v408, %v399
        %v428 = vsel %vm301, %v426, %v417
        %v431 = vsel %vm306, %v427, 0.0
        %432 = vadd.xlane.f32.xlu0 %v431
        %v433 = vpop.xlane.xlu0 %432
        %v434 = vsel %vm306, %v428, 0.0
        %435 = vadd.xlane.f32.xlu0 %v434
        %v436 = vpop.xlane.xlu0 %435
        %v437 = vmul.f32 %v344, %v245
        %v438 = vmul.f32 %v346, %v246
        %v439 = vmul.f32 %v348, %v247
        %v440 = vmul.f32 %v350, %v248
        %v441 = vmul.f32 %v352, %v249
        %v442 = vmul.f32 %v354, %v250
        %v443 = vmul.f32 %v356, %v251
        %v444 = vmul.f32 %v358, %v252
        %453 = vset.pattern.permute.xlu0 0
        %454 = vperm.xlu0 %453, %v437
        %v455 = vpop.permute.xlu0 %454
        %456 = vset.pattern.permute.xlu0 0
        %457 = vperm.xlu0 %456, %v438
        %v458 = vpop.permute.xlu0 %457
        %459 = vset.pattern.permute.xlu0 0
        %460 = vperm.xlu0 %459, %v439
        %v461 = vpop.permute.xlu0 %460
        %462 = vset.pattern.permute.xlu0 0
        %463 = vperm.xlu0 %462, %v440
        %v464 = vpop.permute.xlu0 %463
        %465 = vset.pattern.permute.xlu0 0
        %466 = vperm.xlu0 %465, %v441
        %v467 = vpop.permute.xlu0 %466
        %468 = vset.pattern.permute.xlu0 0
        %469 = vperm.xlu0 %468, %v442
        %v470 = vpop.permute.xlu0 %469
        %471 = vset.pattern.permute.xlu0 0
        %472 = vperm.xlu0 %471, %v443
        %v473 = vpop.permute.xlu0 %472
        %474 = vset.pattern.permute.xlu0 0
        %475 = vperm.xlu0 %474, %v444
        %v476 = vpop.permute.xlu0 %475
        %v477 = vlaneseq
        %v478 = vshrl.u32 %v477, 7
        %v479 = vsub.s32 %v262, %v478
        %v480 = vrot.slane %v455, %v479
        %v481 = vlaneseq
        %v482 = vshrl.u32 %v481, 7
        %v483 = vsub.s32 %v267, %v482
        %v484 = vrot.slane %v458, %v483
        %v485 = vsel %vm272, %v484, %v480
        %v486 = vlaneseq
        %v487 = vshrl.u32 %v486, 7
        %v488 = vsub.s32 %v262, %v487
        %v489 = vrot.slane %v461, %v488
        %v490 = vlaneseq
        %v491 = vshrl.u32 %v490, 7
        %v492 = vsub.s32 %v267, %v491
        %v493 = vrot.slane %v464, %v492
        %v494 = vsel %vm272, %v493, %v489
        %v495 = vlaneseq
        %v496 = vshrl.u32 %v495, 7
        %v497 = vsub.s32 %v262, %v496
        %v498 = vrot.slane %v467, %v497
        %v499 = vlaneseq
        %v500 = vshrl.u32 %v499, 7
        %v501 = vsub.s32 %v267, %v500
        %v502 = vrot.slane %v470, %v501
        %v503 = vsel %vm272, %v502, %v498
        %v504 = vlaneseq
        %v505 = vshrl.u32 %v504, 7
        %v506 = vsub.s32 %v262, %v505
        %v507 = vrot.slane %v473, %v506
        %v508 = vlaneseq
        %v509 = vshrl.u32 %v508, 7
        %v510 = vsub.s32 %v267, %v509
        %v511 = vrot.slane %v476, %v510
        %v512 = vsel %vm272, %v511, %v507
        %v513 = vsel %vm301, %v494, %v485
        %v514 = vsel %vm301, %v512, %v503
        %v517 = vsel %vm306, %v513, 0.0
        %518 = vadd.xlane.f32.xlu0 %v517
        %v519 = vpop.xlane.xlu0 %518
        %v520 = vsel %vm306, %v514, 0.0
        %521 = vadd.xlane.f32.xlu0 %v520
        %v522 = vpop.xlane.xlu0 %521
        %v523 = vrcp.pop %v433
        %v524 = vrcp.pop %v436
        %v525 = vmul.f32 %v433, 4.0
        %v526 = vmul.f32 %v436, 4.0
        %v527 = vlog2.pop %v525
        %v528 = vmul.f32 %v527, 0.6931472
        %v529 = vlog2.pop %v526
        %v530 = vmul.f32 %v529, 0.6931472
        %v531 = vadd.f32 %v309, %v528
        %v532 = vadd.f32 %v312, %v530
        %v533 = vmul.f32 %v519, %v523
        %v534 = vmul.f32 %v522, %v524
        %v535 = vsub.f32 %v531, %v533
        %v536 = vsub.f32 %v532, %v534
        %vm537 = vcmask 1041408
        %v538 = vsel %vm537, %v535, 0.0
        %v539 = vsel %vm537, %v536, 0.0
        %v540 = vadd.f32 %v538, %v539
        %v541 = vsel %vm537, %v540, 0.0
        %v542 = vrot.slane %v541, 4
        %v543 = vadd.f32 %v541, %v542
        %v544 = vrot.slane %v543, 2
        %v545 = vadd.f32 %v543, %v544
        %v546 = vrot.slane %v545, 1
        %v547 = vadd.f32 %v545, %v546
        %v548 = vmul.f32 %v223, 0.25
        %v549 = vmul.f32 %v230, 0.25
        %v550 = vmul.f32 %v237, 0.25
        %v551 = vmul.f32 %v244, 0.25
        %v556 = vsel %vm301, %v549, %v548
        %v557 = vsel %vm301, %v551, %v550
        %v560 = vsel %vm306, %v556, -inf
        %561 = vmax.xlane.f32.xlu0 %v560
        %v562 = vpop.xlane.xlu0 %561
        %v563 = vsel %vm306, %v557, -inf
        %564 = vmax.xlane.f32.xlu0 %v563
        %v565 = vpop.xlane.xlu0 %564
        %v568 = vrot.slane %v562, 1
        %v569 = vrot.slane %v565, 1
        %v574 = vsub.f32 %v548, %v562
        %v575 = vsub.f32 %v549, %v568
        %v576 = vsub.f32 %v550, %v565
        %v577 = vsub.f32 %v551, %v569
        %v578 = vmul.f32 %v574, 1.442695
        %v579 = vpow.pop %v578
        %v580 = vmul.f32 %v575, 1.442695
        %v581 = vpow.pop %v580
        %v582 = vmul.f32 %v576, 1.442695
        %v583 = vpow.pop %v582
        %v584 = vmul.f32 %v577, 1.442695
        %v585 = vpow.pop %v584
        %v590 = vrot.slane %v581, 7
        %v591 = vsel %vm301, %v590, %v579
        %v592 = vrot.slane %v585, 7
        %v593 = vsel %vm301, %v592, %v583
        %v596 = vsel %vm306, %v591, 0.0
        %597 = vadd.xlane.f32.xlu0 %v596
        %v598 = vpop.xlane.xlu0 %597
        %v599 = vsel %vm306, %v593, 0.0
        %600 = vadd.xlane.f32.xlu0 %v599
        %v601 = vpop.xlane.xlu0 %600
        %v602 = vmul.f32 %v579, %v548
        %v603 = vmul.f32 %v581, %v549
        %v604 = vmul.f32 %v583, %v550
        %v605 = vmul.f32 %v585, %v551
        %v610 = vrot.slane %v603, 7
        %v611 = vsel %vm301, %v610, %v602
        %v612 = vrot.slane %v605, 7
        %v613 = vsel %vm301, %v612, %v604
        %v616 = vsel %vm306, %v611, 0.0
        %617 = vadd.xlane.f32.xlu0 %v616
        %v618 = vpop.xlane.xlu0 %617
        %v619 = vsel %vm306, %v613, 0.0
        %620 = vadd.xlane.f32.xlu0 %v619
        %v621 = vpop.xlane.xlu0 %620
        %v622 = vrcp.pop %v598
        %v623 = vrcp.pop %v601
        %v624 = vmul.f32 %v598, 4.0
        %v625 = vmul.f32 %v601, 4.0
        %v626 = vlog2.pop %v624
        %v627 = vmul.f32 %v626, 0.6931472
        %v628 = vlog2.pop %v625
        %v629 = vmul.f32 %v628, 0.6931472
        %v630 = vadd.f32 %v562, %v627
        %v631 = vadd.f32 %v565, %v629
        %v632 = vmul.f32 %v618, %v622
        %v633 = vmul.f32 %v621, %v623
        %v634 = vsub.f32 %v630, %v632
        %v635 = vsub.f32 %v631, %v633
        %v636 = vsel %vm537, %v634, 0.0
        %v637 = vsel %vm537, %v635, 0.0
        %v638 = vadd.f32 %v636, %v637
        %v639 = vsel %vm537, %v638, 0.0
        %v640 = vrot.slane %v639, 4
        %v641 = vadd.f32 %v639, %v640
        %v642 = vrot.slane %v641, 2
        %v643 = vadd.f32 %v641, %v642
        %v644 = vrot.slane %v643, 1
        %v645 = vadd.f32 %v643, %v644
        %p646 = scmp.eq.s32.totalorder %s20, 0
        // Predicated region
        $region29: #{tpu_custom_call.1} parent=23 // pred_check
          %p647 = pneg %p646
        $region30: #{tpu_custom_call.1} parent=23 // pred_check_branch
          %649 = sbr.rel (%p647) target = $region32
        $region31: #{tpu_custom_call.1} parent=23 // pred_region
          %650 = vst.msk [vmem:[#allocation2] sm:$0xff] %vm192, %v188
          %651 = vst.msk [vmem:[#allocation2 + $0x8] sm:$0xff] %vm192, %v189
          %652 = vst.msk [vmem:[#allocation2 + $0x10] sm:$0xff] %vm192, %v190
          %653 = vst.msk [vmem:[#allocation2 + $0x18] sm:$0xff] %vm192, %v191
          %vm654 = vcmask 0
          %655 = vst.msk [vmem:[#allocation3] sm:$0x1] %vm654, %v547
          %656 = vst.msk [vmem:[#allocation4] sm:$0x1] %vm654, %v645
        $region32: #{tpu_custom_call.1} parent=23 // pred_fallthru
          _
        %p657 = scmp.gt.s32.totalorder %s20, 0
        // Predicated region
        $region33: #{tpu_custom_call.1} parent=23 // pred_check
          %p658 = pneg %p657
        $region34: #{tpu_custom_call.1} parent=23 // pred_check_branch
          %660 = sbr.rel (%p658) target = $region36
        $region35: #{tpu_custom_call.1} parent=23 // pred_region
          %v661 = vld [vmem:[#allocation2] sm:$0xff]
          %v662 = vld [vmem:[#allocation2 + $0x8] sm:$0xff]
          %v663 = vld [vmem:[#allocation2 + $0x10] sm:$0xff]
          %v664 = vld [vmem:[#allocation2 + $0x18] sm:$0xff]
          %v665 = vadd.f32 %v661, %v188
          %v666 = vadd.f32 %v662, %v189
          %v667 = vadd.f32 %v663, %v190
          %v668 = vadd.f32 %v664, %v191
          %669 = vst.msk [vmem:[#allocation2] sm:$0xff] %vm192, %v665
          %670 = vst.msk [vmem:[#allocation2 + $0x8] sm:$0xff] %vm192, %v666
          %671 = vst.msk [vmem:[#allocation2 + $0x10] sm:$0xff] %vm192, %v667
          %672 = vst.msk [vmem:[#allocation2 + $0x18] sm:$0xff] %vm192, %v668
          %v673 = vld [vmem:[#allocation3] sm:$0x1]
          %v674 = vadd.f32 %v673, %v547
          %vm675 = vcmask 0
          %676 = vst.msk [vmem:[#allocation3] sm:$0x1] %vm675, %v674
          %v677 = vld [vmem:[#allocation4] sm:$0x1]
          %v678 = vadd.f32 %v677, %v645
          %679 = vst.msk [vmem:[#allocation4] sm:$0x1] %vm675, %v678
        $region36: #{tpu_custom_call.1} parent=23 // pred_fallthru
          _
        // Predicated region
        $region37: #{tpu_custom_call.1} parent=23 // pred_check
          %p680 = pneg %p646
        $region38: #{tpu_custom_call.1} parent=23 // pred_check_branch
          %682 = sbr.rel (%p680) target = $region40
        $region39: #{tpu_custom_call.1} parent=23 // pred_region
          %v683 = vld [vmem:[#allocation2] sm:$0xff]
          %v684 = vld [vmem:[#allocation2 + $0x8] sm:$0xff]
          %v685 = vld [vmem:[#allocation2 + $0x10] sm:$0xff]
          %v686 = vld [vmem:[#allocation2 + $0x18] sm:$0xff]
          %v687 = vsel %vm192, %v683, -inf
          %688 = vmax.xlane.f32.xlu0 %v687
          %v689 = vpop.xlane.xlu0 %688
          %v690 = vsel %vm192, %v684, -inf
          %691 = vmax.xlane.f32.xlu0 %v690
          %v692 = vpop.xlane.xlu0 %691
          %v693 = vsel %vm192, %v685, -inf
          %694 = vmax.xlane.f32.xlu0 %v693
          %v695 = vpop.xlane.xlu0 %694
          %v696 = vsel %vm192, %v686, -inf
          %697 = vmax.xlane.f32.xlu0 %v696
          %v698 = vpop.xlane.xlu0 %697
          %v699 = vmax.f32 %v689, %v692
          %v700 = vrot.slane %v699, 4
          %v701 = vmax.f32 %v699, %v700
          %v702 = vrot.slane %v701, 2
          %v703 = vmax.f32 %v701, %v702
          %v704 = vrot.slane %v703, 1
          %v705 = vmax.f32 %v703, %v704
          %v706 = vmax.f32 %v695, %v698
          %v707 = vrot.slane %v706, 4
          %v708 = vmax.f32 %v706, %v707
          %v709 = vrot.slane %v708, 2
          %v710 = vmax.f32 %v708, %v709
          %v711 = vrot.slane %v710, 1
          %v712 = vmax.f32 %v710, %v711
          %v713 = vmul.f32 %v705, 0.5
          %v714 = vmul.f32 %v712, 0.5
          loop: start=0, step=1, limit=2
          $region41: #{tpu_custom_call.1} parent=39 // loop_pre_header
            _
          $region42: #{tpu_custom_call.1} parent=39 // loop_header
            %s716 = sphi 0, %s720
            %p717 = scmp.ge.s32.totalorder %s716, 2
            %v721 = vphi 0.0, %v755
            %v722 = vphi 0.0, %v756
            %v723 = vphi 0.0, %v777
            %v724 = vphi 0.0, %v778
          $region43: #{tpu_custom_call.1} parent=39 // loop_header_branch
            %719 = sbr.rel (%p717) target = $region47
          $region44: #{tpu_custom_call.1} parent=39 // loop_body
            %s725 = smul.u32 %s716, 8
            %s726 = scalar_lea.vmem [#allocation2], %s725
            %v727 = vld [vmem:[%s726] sm:$0xff]
            %v728 = vld [vmem:[%s726 + $0x10] sm:$0xff]
            %v729 = vmul.f32 %v727, 0.5
            %v730 = vmul.f32 %v728, 0.5
            %v731 = vsub.f32 %v729, %v713
            %v732 = vsub.f32 %v730, %v714
            %v733 = vmul.f32 %v731, 1.442695
            %v734 = vpow.pop %v733
            %v735 = vmul.f32 %v732, 1.442695
            %v736 = vpow.pop %v735
            %v737 = vsel %vm192, %v734, 0.0
            %738 = vadd.xlane.f32.xlu0 %v737
            %v739 = vpop.xlane.xlu0 %738
            %v740 = vsel %vm192, %v736, 0.0
            %741 = vadd.xlane.f32.xlu0 %v740
            %v742 = vpop.xlane.xlu0 %741
            %v743 = vrot.slane %v739, 4
            %v744 = vadd.f32 %v739, %v743
            %v745 = vrot.slane %v744, 2
            %v746 = vadd.f32 %v744, %v745
            %v747 = vrot.slane %v746, 1
            %v748 = vadd.f32 %v746, %v747
            %v749 = vrot.slane %v742, 4
            %v750 = vadd.f32 %v742, %v749
            %v751 = vrot.slane %v750, 2
            %v752 = vadd.f32 %v750, %v751
            %v753 = vrot.slane %v752, 1
            %v754 = vadd.f32 %v752, %v753
            %v755 = vadd.f32 %v721, %v748
            %v756 = vadd.f32 %v722, %v754
            %v757 = vmul.f32 %v734, %v729
            %v758 = vmul.f32 %v736, %v730
            %v759 = vsel %vm192, %v757, 0.0
            %760 = vadd.xlane.f32.xlu0 %v759
            %v761 = vpop.xlane.xlu0 %760
            %v762 = vsel %vm192, %v758, 0.0
            %763 = vadd.xlane.f32.xlu0 %v762
            %v764 = vpop.xlane.xlu0 %763
            %v765 = vrot.slane %v761, 4
            %v766 = vadd.f32 %v761, %v765
            %v767 = vrot.slane %v766, 2
            %v768 = vadd.f32 %v766, %v767
            %v769 = vrot.slane %v768, 1
            %v770 = vadd.f32 %v768, %v769
            %v771 = vrot.slane %v764, 4
            %v772 = vadd.f32 %v764, %v771
            %v773 = vrot.slane %v772, 2
            %v774 = vadd.f32 %v772, %v773
            %v775 = vrot.slane %v774, 1
            %v776 = vadd.f32 %v774, %v775
            %v777 = vadd.f32 %v723, %v770
            %v778 = vadd.f32 %v724, %v776
          $region45: #{tpu_custom_call.1} parent=39 // loop_footer
            %s720 = sadd.s32 1, %s716
          $region46: #{tpu_custom_call.1} parent=39 // loop_footer_branch
            %715 = sbr.rel target = $region42
          $region47: #{tpu_custom_call.1} parent=39 // loop_exit
            _
          %v779 = vrcp.pop %v721
          %v780 = vrcp.pop %v722
          %v781 = vlog2.pop %v721
          %v782 = vmul.f32 %v781, 0.6931472
          %v783 = vlog2.pop %v722
          %v784 = vmul.f32 %v783, 0.6931472
          %v785 = vadd.f32 %v713, %v782
          %v786 = vadd.f32 %v714, %v784
          %v787 = vmul.f32 %v723, %v779
          %v788 = vmul.f32 %v724, %v780
          %v789 = vsub.f32 %v785, %v787
          %v790 = vsub.f32 %v786, %v788
          %v791 = vadd.f32 %v789, %v790
          %v792 = vlaneseq
          %v793 = vshrl.u32 %v792, 7
          %vm794 = vcmp.eq.s32.totalorder %v793, 0
          %v795 = vld [vmem:[#allocation3] sm:$0x1]
          %v797 = vlaneseq
          %v798 = vshrl.u32 %v797, 7
          %v799 = vsub.s32 0, %v798
          %v800 = vrot.slane %v795, %v799
          %801 = vset.pattern.permute.xlu0 0
          %802 = vperm.xlu0 %801, %v800
          %v803 = vpop.permute.xlu0 %802
          %v805 = vsel %vm794, %v803, 0.0
          %vm806 = vcmp.eq.s32.totalorder %v793, 1
          %v807 = vld [vmem:[#allocation4] sm:$0x1]
          %v809 = vlaneseq
          %v810 = vshrl.u32 %v809, 7
          %v811 = vsub.s32 0, %v810
          %v812 = vrot.slane %v807, %v811
          %813 = vset.pattern.permute.xlu0 0
          %814 = vperm.xlu0 %813, %v812
          %v815 = vpop.permute.xlu0 %814
          %v817 = vsel %vm806, %v815, 0.0
          %v818 = vadd.f32 %v805, %v817
          %vm819 = vcmp.eq.s32.totalorder %v793, 2
          %v820 = vsel %vm819, %v791, 0.0
          %v821 = vadd.f32 %v818, %v820
          %822 = vst [vmem:[%s179] sm:$0x7] %v821
        $region40: #{tpu_custom_call.1} parent=23 // pred_fallthru
          _
        %p823 = scmp.lt.s32.totalorder %s19, 1
        %s824 = scalar_select %p823, %s19, 1
        %s825 = smul.addr %s824, 4
        %s826 = scalar_lea.vmem %s1, %s825
        // Predicated region
        $region48: #{tpu_custom_call.1} parent=23 // pred_check
          %p827 = pneg %p73
        $region49: #{tpu_custom_call.1} parent=23 // pred_check_branch
          %829 = sbr.rel (%p827) target = $region51
        $region50: #{tpu_custom_call.1} parent=23 // pred_region
          _
        $region51: #{tpu_custom_call.1} parent=23 // pred_fallthru
          _
      $region24: #{tpu_custom_call.1} parent=5 // pred_fallthru
        _
      %p830 = scmp.le.s32.totalorder 2, %s10
      // Predicated region
      $region52: #{tpu_custom_call.1} parent=5 // pred_check
        %p831 = pneg %p830
      $region53: #{tpu_custom_call.1} parent=5 // pred_check_branch
        %833 = sbr.rel (%p831) target = $region55
      $region54: #{tpu_custom_call.1} parent=5 // pred_region
        %s834 = ssub.s32 %s10, 2
        // Predicated region
        $region56: #{tpu_custom_call.1} parent=54 // pred_check
          %p835 = pneg %p79
        $region57: #{tpu_custom_call.1} parent=54 // pred_check_branch
          %837 = sbr.rel (%p835) target = $region59
        $region58: #{tpu_custom_call.1} parent=54 // pred_region
          %p838 = scmp.lt.s32.totalorder %s21, 1
          %s839 = scalar_select %p838, %s21, 1
          %s840 = smul.addr %s839, 4
          %s841 = scalar_lea.vmem %s1, %s840
        $region59: #{tpu_custom_call.1} parent=54 // pred_fallthru
          _
      $region55: #{tpu_custom_call.1} parent=5 // pred_fallthru
        _
    $region6: #{tpu_custom_call.1} parent=1 // loop_footer
      %s14 = sadd.s32 1, %s10
    $region7: #{tpu_custom_call.1} parent=1 // loop_footer_branch
      %9 = sbr.rel target = $region3
    $region8: #{tpu_custom_call.1} parent=1 // loop_exit
      _
    %842 = vsyncpa [#allocation6], 1
    %s843 = scalar_lea.sflag [#allocation6], 1
    %844 = vsyncpa %s843, 1

</llo_original>
